<compile_context>
chip_gen: v7x
topology: tpu7x:2x2x1
jax: 0.10.0
libtpu: 0.0.40
codegen_flags: <defaults>
</compile_context>

<pallas_src>
import functools

import jax
import jax.numpy as jnp
from jax.experimental import pallas as pl
from jax.experimental.pallas import tpu as pltpu


LANE = 128                  # TPU lane width; all feature dims padded to this.
SUBLANE = 8                 # sublane alignment for the input feature dim.
DEFAULT_BATCH_TILE = 128    # rows of the batch processed per grid step.


def _round_up(n, m):
    return ((n + m - 1) // m) * m


# ----------------------------- Pallas kernel --------------------------------

def _mlp_kernel(x_ref, w_ref, b_ref, o_ref, *, num_layers, in_rows):
    """Fused MLP: sigmoid on hidden layers, linear output layer.

    x_ref : (BT, in_rows)  f32      input rows (feature dim padded to 8)
    w_ref : (L, D, D)      bf16     zero-padded weight slab, VMEM-resident
    b_ref : (L, 1, D)      f32      zero-padded bias slab,   VMEM-resident
    o_ref : (BT, D)        f32      lane-dense (padded) output block
    """
    # bf16 operands on the MXU with f32 accumulation; bias-add + sigmoid in f32.
    h = x_ref[...].astype(jnp.bfloat16)
    for i in range(num_layers):                 # static Python loop (L is tiny)
        if i == 0:
            # Only the valid (sublane-aligned) rows of W1 are needed.
            w = w_ref[0, :in_rows, :]
        else:
            w = w_ref[i]
        y = jnp.dot(h, w, preferred_element_type=jnp.float32) + b_ref[i]
        if i < num_layers - 1:
            h = jax.nn.sigmoid(y).astype(jnp.bfloat16)
        else:
            o_ref[...] = y                      # final layer: no activation


# ------------------------------ Wrapper --------------------------------------

def neural_net_forward(x, w_slab, b_slab, out_features,
                       *, block_batch=DEFAULT_BATCH_TILE):
    """Run the fused MLP on a batch of states.

    `w_slab` / `b_slab` come from `pack_params`; returns (batch, out) float32.
    """
    num_layers, d, _ = w_slab.shape
    batch, in_features = x.shape
    x = x.astype(jnp.float32)

    # Pad the input feature dim to a sublane multiple (kept narrow: no 128 pad).
    in_rows = _round_up(in_features, SUBLANE)
    if in_rows != in_features:
        x = jnp.pad(x, ((0, 0), (0, in_rows - in_features)))

    # Pad the batch to a multiple of the batch tile.
    bt = min(block_batch, max(SUBLANE, _round_up(batch, SUBLANE)))
    padded_batch = _round_up(batch, bt)
    if padded_batch != batch:
        x = jnp.pad(x, ((0, padded_batch - batch), (0, 0)))
    grid = (pl.cdiv(padded_batch, bt),)

    kernel = functools.partial(_mlp_kernel, num_layers=num_layers,
                               in_rows=in_rows)

    # Advisory cost hint: this call is tiny; don't serialize work around it.
    flops = 2 * padded_batch * (in_rows * d + (num_layers - 1) * d * d)
    transcendentals = padded_batch * (num_layers - 1) * d
    bytes_accessed = (padded_batch * in_rows * 4
                      + int(w_slab.size) * 2 + int(b_slab.size) * 4
                      + padded_batch * d * 4)

    out = pl.pallas_call(
        kernel,
        out_shape=jax.ShapeDtypeStruct((padded_batch, d), jnp.float32),
        grid=grid,
        in_specs=[
            # x: one batch tile per grid step.
            pl.BlockSpec((bt, in_rows), lambda i: (i, 0)),
            # packed weights / biases: constant index_map -> VMEM-resident,
            # DMA'd once rather than per grid step.
            pl.BlockSpec((num_layers, d, d), lambda i: (0, 0, 0)),
            pl.BlockSpec((num_layers, 1, d), lambda i: (0, 0, 0)),
        ],
        out_specs=pl.BlockSpec((bt, d), lambda i: (i, 0)),
        compiler_params=pltpu.CompilerParams(
            # batch axis is embarrassingly parallel (v7x: both TensorCores).
            dimension_semantics=("parallel",)),
        cost_estimate=pl.CostEstimate(flops=flops,
                                      transcendentals=transcendentals,
                                      bytes_accessed=bytes_accessed),
    )(x, w_slab, b_slab)

    # Strip batch padding and the lane padding of the output layer.
    return out[:batch, :out_features]


# --------------------------- Parameter handling ------------------------------

def init_params(key, input_size, output_size, l1_size, l2_size, l3_size):
    """Deterministic synthetic parameters with the same shapes as the module.

    Note: the PyTorch __init__ zero-initializes the weights; here we use small
    deterministic random values so the kernel's matmuls are non-trivial.
    Weights are stored as (in_features, out_features) == PyTorch W.T.
    """
    has_fourth = l3_size > 0
    if has_fourth:
        dims = [(input_size, l1_size), (l1_size, l2_size),
                (l2_size, l3_size), (l3_size, output_size)]
    else:
        dims = [(input_size, l1_size), (l1_size, l2_size),
                (l2_size, output_size)]
    params = []
    for (fan_in, fan_out) in dims:
        key, kw, kb = jax.random.split(key, 3)
        bound = 1.0 / jnp.sqrt(jnp.float32(fan_in))
        w = jax.random.uniform(kw, (fan_in, fan_out), jnp.float32, -bound, bound)
        b = jax.random.uniform(kb, (1, fan_out), jnp.float32, -bound, bound)
        params += [w, b]
    return tuple(params)


def pack_params(params):
    """Pack flat (w1,b1,w2,b2,...) params into two padded VMEM-friendly slabs.

    Weights are (in, out) = PyTorch W.T.  All feature dims are zero-padded to a
    multiple of 128 lanes; zero weight rows exactly cancel the sigmoid(0)=0.5
    produced in padded activation columns, so padding is numerically exact.
    Weights are stored as bf16 (MXU operands); biases stay f32.
    """
    num_layers = len(params) // 2
    dims = []
    for i in range(num_layers):
        dims += list(params[2 * i].shape)
    d = _round_up(max(dims), LANE)
    w_slab = jnp.zeros((num_layers, d, d), jnp.bfloat16)
    b_slab = jnp.zeros((num_layers, 1, d), jnp.float32)
    for i in range(num_layers):
        w, b = params[2 * i], params[2 * i + 1]
        w_slab = w_slab.at[i, :w.shape[0], :w.shape[1]].set(w.astype(jnp.bfloat16))
        b_slab = b_slab.at[i, :, :b.shape[1]].set(b.astype(jnp.float32))
    return w_slab, b_slab


# ------------------------------ References -----------------------------------

def reference_forward(x, params):
    """Pure-JAX f32 reference mirroring the PyTorch forward semantics."""
    x = x.astype(jnp.float32)
    n_layers = len(params) // 2
    h = x
    for i in range(n_layers - 1):
        w, b = params[2 * i], params[2 * i + 1]
        h = jax.nn.sigmoid(h @ w + b)
    w, b = params[-2], params[-1]
    return h @ w + b


def reference_forward_matched(x, params):
    """Pure-JAX reference using the same bf16-operand / f32-accumulate math."""
    n_layers = len(params) // 2
    h = x.astype(jnp.float32)
    for i in range(n_layers):
        w, b = params[2 * i], params[2 * i + 1]
        y = jnp.dot(h.astype(jnp.bfloat16), w.astype(jnp.bfloat16),
                    preferred_element_type=jnp.float32) + b
        h = jax.nn.sigmoid(y) if i < n_layers - 1 else y
    return h


# ------------------------------- Main -----------------------------------------

if __name__ == "__main__":
    key = jax.random.PRNGKey(0)

    input_size, output_size = 32, 8
    l1_size, l2_size, l3_size = 64, 32, 16      # l3_size > 0 -> 4-layer path

    key, kx4, kx3, kp4, kp3 = jax.random.split(key, 5)

    forward = jax.jit(neural_net_forward, static_argnums=(3,))

    # ---- 4-layer variant, batched call (amortizes launch/DMA overhead) ----
    batch4 = 256
    x4 = jax.random.normal(kx4, (batch4, input_size), jnp.float32)
    params4 = init_params(kp4, input_size, output_size, l1_size, l2_size, l3_size)
    w_slab4, b_slab4 = pack_params(params4)
    out4 = jax.block_until_ready(forward(x4, w_slab4, b_slab4, output_size))
    assert out4.shape == (batch4, output_size) and out4.dtype == jnp.float32
    assert jnp.allclose(out4, reference_forward_matched(x4, params4),
                        atol=2e-3, rtol=2e-3)
    assert jnp.allclose(out4, reference_forward(x4, params4),
                        atol=5e-2, rtol=5e-2)

    # ---- 3-layer variant (l3_size == 0), ragged small batch (pads to 8) ----
    batch3 = 6
    x3 = jax.random.normal(kx3, (batch3, input_size), jnp.float32)
    params3 = init_params(kp3, input_size, output_size, l1_size, l2_size, 0)
    w_slab3, b_slab3 = pack_params(params3)
    out3 = jax.block_until_ready(forward(x3, w_slab3, b_slab3, output_size))
    assert out3.shape == (batch3, output_size) and out3.dtype == jnp.float32
    assert jnp.allclose(out3, reference_forward_matched(x3, params3),
                        atol=2e-3, rtol=2e-3)
    assert jnp.allclose(out3, reference_forward(x3, params3),
                        atol=5e-2, rtol=5e-2)

    print("KERNEL_OK")
</pallas_src>

<mosaic_0001>
module attributes {stable_mosaic.version = 11 : i64} {
  func.func @_mlp_kernel(%arg0: i32, %arg1: memref<128x32xf32, #tpu.memory_space<vmem>>, %arg2: memref<4x128x128xbf16, #tpu.memory_space<vmem>>, %arg3: memref<4x1x128xf32, #tpu.memory_space<vmem>>, %arg4: memref<128x128xf32, #tpu.memory_space<vmem>>) attributes {dimension_semantics = [#tpu.dimension_semantics<parallel>], iteration_bounds = array<i64: 2>, scalar_prefetch = 0 : i64, scratch_operands = 0 : i64, tpu.core_type = #tpu.core_type<tc>, window_params = [{transform_indices = @transform_0, window_bounds = array<i64: 128, 32>}, {pipeline_mode = #tpu.pipeline_mode<synchronous>, transform_indices = @transform_1, window_bounds = array<i64: 4, 128, 128>}, {pipeline_mode = #tpu.pipeline_mode<synchronous>, transform_indices = @transform_2, window_bounds = array<i64: 4, 1, 128>}, {transform_indices = @transform_3, window_bounds = array<i64: 128, 128>}]} {
    %c0 = arith.constant 0 : index
    %c0_0 = arith.constant 0 : index
    %0 = vector.load %arg1[%c0, %c0_0] : memref<128x32xf32, #tpu.memory_space<vmem>>, vector<128x32xf32>
    %1 = arith.truncf %0 : vector<128x32xf32> to vector<128x32xbf16>
    %c0_1 = arith.constant 0 : index
    %c0_2 = arith.constant 0 : index
    %c0_3 = arith.constant 0 : index
    %2 = vector.load %arg2[%c0_1, %c0_2, %c0_3] : memref<4x128x128xbf16, #tpu.memory_space<vmem>>, vector<1x32x128xbf16>
    %3 = vector.shape_cast %2 : vector<1x32x128xbf16> to vector<32x128xbf16>
    %cst = arith.constant dense<0.000000e+00> : vector<128x128xf32>
    %4 = tpu.matmul %1, %3, %cst {dimension_numbers = #tpu.dot_dimension_numbers<[1], [0], [0], [1], [0, 0, 1, 1], [], []>} : vector<128x32xbf16>, vector<32x128xbf16>, vector<128x128xf32> -> vector<128x128xf32>
    %c0_4 = arith.constant 0 : index
    %c0_5 = arith.constant 0 : index
    %c0_6 = arith.constant 0 : index
    %5 = vector.load %arg3[%c0_4, %c0_5, %c0_6] : memref<4x1x128xf32, #tpu.memory_space<vmem>>, vector<1x1x128xf32>
    %6 = vector.shape_cast %5 : vector<1x1x128xf32> to vector<1x128xf32>
    %7 = vector.broadcast %6 : vector<1x128xf32> to vector<128x128xf32>
    %8 = arith.addf %4, %7 : vector<128x128xf32>
    %9 = arith.negf %8 : vector<128x128xf32>
    %10 = math.exp %9 : vector<128x128xf32>
    %cst_7 = arith.constant 1.000000e+00 : f32
    %11 = vector.broadcast %cst_7 : f32 to vector<128x128xf32>
    %12 = arith.addf %11, %10 : vector<128x128xf32>
    %13 = arith.divf %11, %12 : vector<128x128xf32>
    %14 = arith.truncf %13 : vector<128x128xf32> to vector<128x128xbf16>
    %c1 = arith.constant 1 : index
    %c0_8 = arith.constant 0 : index
    %c0_9 = arith.constant 0 : index
    %15 = vector.load %arg2[%c1, %c0_8, %c0_9] : memref<4x128x128xbf16, #tpu.memory_space<vmem>>, vector<1x128x128xbf16>
    %16 = vector.shape_cast %15 : vector<1x128x128xbf16> to vector<128x128xbf16>
    %cst_10 = arith.constant dense<0.000000e+00> : vector<128x128xf32>
    %17 = tpu.matmul %14, %16, %cst_10 {dimension_numbers = #tpu.dot_dimension_numbers<[1], [0], [0], [1], [0, 0, 1, 1], [], []>} : vector<128x128xbf16>, vector<128x128xbf16>, vector<128x128xf32> -> vector<128x128xf32>
    %c1_11 = arith.constant 1 : index
    %c0_12 = arith.constant 0 : index
    %c0_13 = arith.constant 0 : index
    %18 = vector.load %arg3[%c1_11, %c0_12, %c0_13] : memref<4x1x128xf32, #tpu.memory_space<vmem>>, vector<1x1x128xf32>
    %19 = vector.shape_cast %18 : vector<1x1x128xf32> to vector<1x128xf32>
    %20 = vector.broadcast %19 : vector<1x128xf32> to vector<128x128xf32>
    %21 = arith.addf %17, %20 : vector<128x128xf32>
    %22 = arith.negf %21 : vector<128x128xf32>
    %23 = math.exp %22 : vector<128x128xf32>
    %cst_14 = arith.constant 1.000000e+00 : f32
    %24 = vector.broadcast %cst_14 : f32 to vector<128x128xf32>
    %25 = arith.addf %24, %23 : vector<128x128xf32>
    %26 = arith.divf %24, %25 : vector<128x128xf32>
    %27 = arith.truncf %26 : vector<128x128xf32> to vector<128x128xbf16>
    %c2 = arith.constant 2 : index
    %c0_15 = arith.constant 0 : index
    %c0_16 = arith.constant 0 : index
    %28 = vector.load %arg2[%c2, %c0_15, %c0_16] : memref<4x128x128xbf16, #tpu.memory_space<vmem>>, vector<1x128x128xbf16>
    %29 = vector.shape_cast %28 : vector<1x128x128xbf16> to vector<128x128xbf16>
    %cst_17 = arith.constant dense<0.000000e+00> : vector<128x128xf32>
    %30 = tpu.matmul %27, %29, %cst_17 {dimension_numbers = #tpu.dot_dimension_numbers<[1], [0], [0], [1], [0, 0, 1, 1], [], []>} : vector<128x128xbf16>, vector<128x128xbf16>, vector<128x128xf32> -> vector<128x128xf32>
    %c2_18 = arith.constant 2 : index
    %c0_19 = arith.constant 0 : index
    %c0_20 = arith.constant 0 : index
    %31 = vector.load %arg3[%c2_18, %c0_19, %c0_20] : memref<4x1x128xf32, #tpu.memory_space<vmem>>, vector<1x1x128xf32>
    %32 = vector.shape_cast %31 : vector<1x1x128xf32> to vector<1x128xf32>
    %33 = vector.broadcast %32 : vector<1x128xf32> to vector<128x128xf32>
    %34 = arith.addf %30, %33 : vector<128x128xf32>
    %35 = arith.negf %34 : vector<128x128xf32>
    %36 = math.exp %35 : vector<128x128xf32>
    %cst_21 = arith.constant 1.000000e+00 : f32
    %37 = vector.broadcast %cst_21 : f32 to vector<128x128xf32>
    %38 = arith.addf %37, %36 : vector<128x128xf32>
    %39 = arith.divf %37, %38 : vector<128x128xf32>
    %40 = arith.truncf %39 : vector<128x128xf32> to vector<128x128xbf16>
    %c3 = arith.constant 3 : index
    %c0_22 = arith.constant 0 : index
    %c0_23 = arith.constant 0 : index
    %41 = vector.load %arg2[%c3, %c0_22, %c0_23] : memref<4x128x128xbf16, #tpu.memory_space<vmem>>, vector<1x128x128xbf16>
    %42 = vector.shape_cast %41 : vector<1x128x128xbf16> to vector<128x128xbf16>
    %cst_24 = arith.constant dense<0.000000e+00> : vector<128x128xf32>
    %43 = tpu.matmul %40, %42, %cst_24 {dimension_numbers = #tpu.dot_dimension_numbers<[1], [0], [0], [1], [0, 0, 1, 1], [], []>} : vector<128x128xbf16>, vector<128x128xbf16>, vector<128x128xf32> -> vector<128x128xf32>
    %c3_25 = arith.constant 3 : index
    %c0_26 = arith.constant 0 : index
    %c0_27 = arith.constant 0 : index
    %44 = vector.load %arg3[%c3_25, %c0_26, %c0_27] : memref<4x1x128xf32, #tpu.memory_space<vmem>>, vector<1x1x128xf32>
    %45 = vector.shape_cast %44 : vector<1x1x128xf32> to vector<1x128xf32>
    %46 = vector.broadcast %45 : vector<1x128xf32> to vector<128x128xf32>
    %47 = arith.addf %43, %46 : vector<128x128xf32>
    %c0_28 = arith.constant 0 : index
    %c0_29 = arith.constant 0 : index
    %48 = vector.load %arg4[%c0_28, %c0_29] : memref<128x128xf32, #tpu.memory_space<vmem>>, vector<128x128xf32>
    tpu.vector_store %arg4[%c0_28, %c0_29], %47 {strides = array<i32>} : memref<128x128xf32, #tpu.memory_space<vmem>>, vector<128x128xf32>,
    return
  }
  func.func @transform_0(%arg0: i32) -> (i32, i32) {
    %c0_i32 = arith.constant 0 : i32
    %c0_i32_0 = arith.constant 0 : i32
    return %arg0, %c0_i32 : i32, i32
  }
  func.func @transform_1(%arg0: i32) -> (i32, i32, i32) {
    %c0_i32 = arith.constant 0 : i32
    %c0_i32_0 = arith.constant 0 : i32
    %c0_i32_1 = arith.constant 0 : i32
    %c0_i32_2 = arith.constant 0 : i32
    return %c0_i32, %c0_i32_0, %c0_i32_1 : i32, i32, i32
  }
  func.func @transform_2(%arg0: i32) -> (i32, i32, i32) {
    %c0_i32 = arith.constant 0 : i32
    %c0_i32_0 = arith.constant 0 : i32
    %c0_i32_1 = arith.constant 0 : i32
    %c0_i32_2 = arith.constant 0 : i32
    return %c0_i32, %c0_i32_0, %c0_i32_1 : i32, i32, i32
  }
  func.func @transform_3(%arg0: i32) -> (i32, i32) {
    %c0_i32 = arith.constant 0 : i32
    %c0_i32_0 = arith.constant 0 : i32
    return %arg0, %c0_i32 : i32, i32
  }
}

</mosaic_0001>

<llo_original>
// kernel: neural_net_forward.1
$region0: #{neural_net_forward.1}
  #allocation0 [shape = 'u32[]', space=smem, size = 0x4, offset = 0x4, fixed_abs, tag = 'smem constant byte address 0x4 - core index']
  #allocation1 [shape = 'u32[144,128]{1,0:T(1,128)}', space=vmem, size = 0x12000, scoped, tag = 'internal scratch']
  %s0 = inlined_call_operand.vmem [shape: f32[256,32], index: 0, kind: input, shape index: {}]
  %s1 = inlined_call_operand.vmem [shape: bf16[4,128,128], index: 1, kind: input, shape index: {}]
  %s2 = inlined_call_operand.vmem [shape: f32[4,1,128], index: 2, kind: input, shape index: {}]
  %s3 = inlined_call_operand.vmem [shape: f32[256,128], index: 3, kind: output, shape index: {}]
  %s4 = sld [smem:[#allocation0]]
  $region45: #{neural_net_forward.1} parent=0
    _
  %s6 = ssub.s32 1, %s4
  %s7 = scalar_select 0, %s6, %s4
  loop: start=0, step=1, limit=4
  $region2: #{neural_net_forward.1} parent=0 // loop_pre_header
    _
  $region3: #{neural_net_forward.1} parent=0 // loop_header
    %s9 = sphi 0, %s13
    %p10 = scmp.ge.s32.totalorder %s9, 4
    %s19 = sphi 0, %s21
    %s22 = sphi 0, %s19
    %s23 = sphi 0, %s22
    %s39 = sphi 0, %s23
    %s43 = sphi 0, %s43
    %s45 = sphi 0, %s43
    %s46 = sphi 0, %s45
    %s60 = sphi 0, %s46
    %s64 = sphi 0, %s64
    %s66 = sphi 0, %s64
    %s67 = sphi 0, %s66
    %s81 = sphi 0, %s67
    %s87 = sphi 0, %s89
    %s90 = sphi 0, %s87
    %s91 = sphi 0, %s90
    %s107 = sphi 0, %s91
  $region4: #{neural_net_forward.1} parent=0 // loop_header_branch
    %12 = sbr.rel (%p10) target = $region8
  $region5: #{neural_net_forward.1} parent=0 // loop_body
    %s14 = ssub.s32 %s9, 1
    %s15 = ssub.s32 %s9, 2
    %s16 = sadd.s32 %s9, 1
    %s17 = ssub.s32 %s9, %s16
    %p18 = scmp.eq.s32.totalorder %s17, 0
    %s20 = sadd.s32 %s19, 1
    %s21 = scalar_select %p18, %s19, %s20
    %p24 = pneg %p18
    %p25 = scmp.eq.s32.totalorder %s9, 1
    %p26 = por %p24, %p25
    %p27 = scmp.ne.s32.totalorder %s19, %s22
    %p28 = scmp.eq.s32.totalorder %s9, 0
    %p29 = por %p27, %p28
    %p30 = scmp.ne.s32.totalorder %s19, %s22
    %p31 = scmp.eq.s32.totalorder %s14, 1
    %p32 = por %p30, %p31
    %p33 = scmp.ne.s32.totalorder %s22, %s23
    %p34 = scmp.eq.s32.totalorder %s14, 0
    %p35 = por %p33, %p34
    %p36 = scmp.ne.s32.totalorder %s22, %s23
    %p37 = scmp.eq.s32.totalorder %s15, 1
    %p38 = por %p36, %p37
    %p40 = scmp.ne.s32.totalorder %s23, %s39
    %p41 = scmp.eq.s32.totalorder %s15, 0
    %p42 = por %p40, %p41
    %s44 = sadd.s32 %s43, 1
    %p47 = scmp.eq.s32.totalorder %s9, 1
    %p48 = scmp.ne.s32.totalorder %s43, %s45
    %p49 = scmp.eq.s32.totalorder %s9, 0
    %p50 = por %p48, %p49
    %p51 = scmp.ne.s32.totalorder %s43, %s45
    %p52 = scmp.eq.s32.totalorder %s14, 1
    %p53 = por %p51, %p52
    %p54 = scmp.ne.s32.totalorder %s45, %s46
    %p55 = scmp.eq.s32.totalorder %s14, 0
    %p56 = por %p54, %p55
    %p57 = scmp.ne.s32.totalorder %s45, %s46
    %p58 = scmp.eq.s32.totalorder %s15, 1
    %p59 = por %p57, %p58
    %p61 = scmp.ne.s32.totalorder %s46, %s60
    %p62 = scmp.eq.s32.totalorder %s15, 0
    %p63 = por %p61, %p62
    %s65 = sadd.s32 %s64, 1
    %p68 = scmp.eq.s32.totalorder %s9, 1
    %p69 = scmp.ne.s32.totalorder %s64, %s66
    %p70 = scmp.eq.s32.totalorder %s9, 0
    %p71 = por %p69, %p70
    %p72 = scmp.ne.s32.totalorder %s64, %s66
    %p73 = scmp.eq.s32.totalorder %s14, 1
    %p74 = por %p72, %p73
    %p75 = scmp.ne.s32.totalorder %s66, %s67
    %p76 = scmp.eq.s32.totalorder %s14, 0
    %p77 = por %p75, %p76
    %p78 = scmp.ne.s32.totalorder %s66, %s67
    %p79 = scmp.eq.s32.totalorder %s15, 1
    %p80 = por %p78, %p79
    %p82 = scmp.ne.s32.totalorder %s67, %s81
    %p83 = scmp.eq.s32.totalorder %s15, 0
    %p84 = por %p82, %p83
    %s85 = ssub.s32 %s9, %s16
    %p86 = scmp.eq.s32.totalorder %s85, 0
    %s88 = sadd.s32 %s87, 1
    %s89 = scalar_select %p86, %s87, %s88
    %p92 = pneg %p86
    %p93 = scmp.eq.s32.totalorder %s9, 1
    %p94 = por %p92, %p93
    %p95 = scmp.ne.s32.totalorder %s87, %s90
    %p96 = scmp.eq.s32.totalorder %s9, 0
    %p97 = por %p95, %p96
    %p98 = scmp.ne.s32.totalorder %s87, %s90
    %p99 = scmp.eq.s32.totalorder %s14, 1
    %p100 = por %p98, %p99
    %p101 = scmp.ne.s32.totalorder %s90, %s91
    %p102 = scmp.eq.s32.totalorder %s14, 0
    %p103 = por %p101, %p102
    %p104 = scmp.ne.s32.totalorder %s90, %s91
    %p105 = scmp.eq.s32.totalorder %s15, 1
    %p106 = por %p104, %p105
    %p108 = scmp.ne.s32.totalorder %s91, %s107
    %p109 = scmp.eq.s32.totalorder %s15, 0
    %p110 = por %p108, %p109
    %p111 = scmp.le.s32.totalorder 1, %s9
    %p112 = scmp.lt.s32.totalorder %s9, 3
    %p113 = pnand %p111, %p112
    %p114 = pneg %p113
    // Predicated region
    $region9: #{neural_net_forward.1} parent=5 // pred_check
      _
    $region10: #{neural_net_forward.1} parent=5 // pred_check_branch
      %116 = sbr.rel (%p113) target = $region12
    $region11: #{neural_net_forward.1} parent=5 // pred_region
      %s117 = ssub.s32 %s9, 1
      // Predicated region
      $region13: #{neural_net_forward.1} parent=11 // pred_check
        %p118 = pneg %p56
      $region14: #{neural_net_forward.1} parent=11 // pred_check_branch
        %120 = sbr.rel (%p118) target = $region16
      $region15: #{neural_net_forward.1} parent=11 // pred_region
        _
      $region16: #{neural_net_forward.1} parent=11 // pred_fallthru
        _
      // Predicated region
      $region17: #{neural_net_forward.1} parent=11 // pred_check
        %p121 = pneg %p77
      $region18: #{neural_net_forward.1} parent=11 // pred_check_branch
        %123 = sbr.rel (%p121) target = $region20
      $region19: #{neural_net_forward.1} parent=11 // pred_region
        _
      $region20: #{neural_net_forward.1} parent=11 // pred_fallthru
        _
    $region12: #{neural_net_forward.1} parent=5 // pred_fallthru
      _
    %p124 = scmp.lt.s32.totalorder %s9, 2
    // Predicated region
    $region21: #{neural_net_forward.1} parent=5 // pred_check
      %p125 = pneg %p124
    $region22: #{neural_net_forward.1} parent=5 // pred_check_branch
      %127 = sbr.rel (%p125) target = $region24
    $region23: #{neural_net_forward.1} parent=5 // pred_region
      // Predicated region
      $region25: #{neural_net_forward.1} parent=23 // pred_check
        %p128 = pneg %p29
      $region26: #{neural_net_forward.1} parent=23 // pred_check_branch
        %130 = sbr.rel (%p128) target = $region28
      $region27: #{neural_net_forward.1} parent=23 // pred_region
        %s131 = smul.u32 16, %s9
        %p132 = scmp.lt.s32.totalorder %s131, 31
        %s133 = scalar_select %p132, %s131, 31
        %s134 = smul.addr %s133, 8
        %s135 = scalar_lea.vmem %s0, %s134
        %s136 = smul.u32 16, %s9
      $region28: #{neural_net_forward.1} parent=23 // pred_fallthru
        _
    $region24: #{neural_net_forward.1} parent=5 // pred_fallthru
      _
    %p137 = scmp.le.s32.totalorder 1, %s9
    %p138 = scmp.lt.s32.totalorder %s9, 3
    %p139 = pnand %p137, %p138
    %p140 = pneg %p139
    // Predicated region
    $region29: #{neural_net_forward.1} parent=5 // pred_check
      _
    $region30: #{neural_net_forward.1} parent=5 // pred_check_branch
      %142 = sbr.rel (%p139) target = $region32
    $region31: #{neural_net_forward.1} parent=5 // pred_region
      %s143 = ssub.s32 %s9, 1
      %s144 = smul.u32 16, %s14
      %p145 = scmp.lt.s32.totalorder %s144, 31
      %s146 = scalar_select %p145, %s144, 31
      %s147 = smul.addr %s146, 8
      %s148 = scalar_lea.vmem %s0, %s147
      %p149 = pneg %p35
      %p150 = pneg %p32
      %p151 = pneg %p56
      %p152 = pneg %p53
      %p153 = pneg %p77
      %p154 = pneg %p74
      %p155 = pneg %p103
      %p156 = pneg %p100
      %s157 = smul.u32 16, %s14
      %p158 = scmp.lt.s32.totalorder %s157, 31
      %s159 = scalar_select %p158, %s157, 31
      %s160 = smul.addr %s159, 8
      %s161 = scalar_lea.vmem %s3, %s160
      %s162 = smul.u32 16, %s14
      %p163 = scmp.lt.s32.totalorder %s162, 31
      %s164 = scalar_select %p163, %s162, 31
      %s165 = smul.addr %s164, 8
      %s166 = scalar_lea.vmem %s0, %s165
      %s167 = smul.u32 16, %s14
      %s168 = smul.u32 16, %s14
      %p169 = scmp.lt.s32.totalorder %s168, 31
      %s170 = scalar_select %p169, %s168, 31
      %s171 = smul.addr %s170, 8
      %s172 = scalar_lea.vmem %s3, %s171
      %s173 = smul.u32 16, %s14
      %v175 = vld [vmem:[%s166] sm:$0xff]
      %v176 = vld [vmem:[%s166 + $0x8] sm:$0xff]
      %v177 = vld [vmem:[%s166 + $0x10] sm:$0xff]
      %v178 = vld [vmem:[%s166 + $0x18] sm:$0xff]
      %v179 = vld [vmem:[%s166 + $0x20] sm:$0xff]
      %v180 = vld [vmem:[%s166 + $0x28] sm:$0xff]
      %v181 = vld [vmem:[%s166 + $0x30] sm:$0xff]
      %v182 = vld [vmem:[%s166 + $0x38] sm:$0xff]
      %v183 = vld [vmem:[%s166 + $0x40] sm:$0xff]
      %v184 = vld [vmem:[%s166 + $0x48] sm:$0xff]
      %v185 = vld [vmem:[%s166 + $0x50] sm:$0xff]
      %v186 = vld [vmem:[%s166 + $0x58] sm:$0xff]
      %v187 = vld [vmem:[%s166 + $0x60] sm:$0xff]
      %v188 = vld [vmem:[%s166 + $0x68] sm:$0xff]
      %v189 = vld [vmem:[%s166 + $0x70] sm:$0xff]
      %v190 = vld [vmem:[%s166 + $0x78] sm:$0xff]
      %v191 = vpack.c.bf16 %v176, %v175
      %v192 = vpack.c.bf16 %v178, %v177
      %v193 = vpack.c.bf16 %v180, %v179
      %v194 = vpack.c.bf16 %v182, %v181
      %v195 = vpack.c.bf16 %v184, %v183
      %v196 = vpack.c.bf16 %v186, %v185
      %v197 = vpack.c.bf16 %v188, %v187
      %v198 = vpack.c.bf16 %v190, %v189
      %v199 = vld [vmem:[%s1] sm:$0xf]
      %v200 = vld [vmem:[%s1 + $0x4] sm:$0xf]
      %v201 = vld [vmem:[%s1 + $0x8] sm:$0xf]
      %v202 = vld [vmem:[%s1 + $0xc] sm:$0xf]
      %v203 = vld [vmem:[%s2] sm:$0x1]
      %v205 = vlaneseq
      %v206 = vshrl.u32 %v205, 7
      %v207 = vsub.s32 0, %v206
      %v208 = vrot.slane %v203, %v207
      %v214 = vunpack.c.l.b16 %v199
      %v215 = vunpack.c.l.b16 %v200
      %v216 = vunpack.c.l.b16 %v201
      %v217 = vunpack.c.l.b16 %v202
      %v218 = vpack.c.b16 %v215, %v214
      %v219 = vpack.c.b16 %v217, %v216
      %vm222 = vcmask 261120
      %v224 = vsel %vm222, %v191, 0
      %v227 = vsel %vm222, %v192, 0
      %v230 = vsel %vm222, %v193, 0
      %v233 = vsel %vm222, %v194, 0
      %v236 = vsel %vm222, %v195, 0
      %v239 = vsel %vm222, %v196, 0
      %v242 = vsel %vm222, %v197, 0
      %v245 = vsel %vm222, %v198, 0
      %247 = vmatprep.subr.bf16.mxu0 0
      %248 = vmatpush1.bf16.msra.mxu0 %v218
      %249 = vmatprep.subr.bf16.mxu0 0
      %250 = vmatpush1.bf16.msra.mxu0 %v219
      %251 = vmatprep.subr.bf16.mxu0 0
      %252 = vmatpush1.bf16.msra.mxu0 0
      %253 = vmatprep.subr.bf16.mxu0 0
      %254 = vmatpush1.bf16.msra.mxu0 0
      %255 = vmatprep.subr.bf16.mxu0 0
      %256 = vmatpush1.bf16.msra.mxu0 0
      %257 = vmatprep.subr.bf16.mxu0 0
      %258 = vmatpush1.bf16.msra.mxu0 0
      %259 = vmatprep.subr.bf16.mxu0 0
      %260 = vmatpush1.bf16.msra.mxu0 0
      %261 = vmatprep.subr.bf16.mxu0 0
      %262 = vmatpush1.bf16.msra.mxu0 0
      %263 = vmatprep.subr.bf16.mxu0 0
      %264 = vmatpush1.bf16.msra.mxu0 0
      %265 = vmatprep.subr.bf16.mxu0 0
      %266 = vmatpush1.bf16.msra.mxu0 0
      %267 = vmatprep.subr.bf16.mxu0 0
      %268 = vmatpush1.bf16.msra.mxu0 0
      %269 = vmatprep.subr.bf16.mxu0 0
      %270 = vmatpush1.bf16.msra.mxu0 0
      %271 = vmatprep.subr.bf16.mxu0 0
      %272 = vmatpush1.bf16.msra.mxu0 0
      %273 = vmatprep.subr.bf16.mxu0 0
      %274 = vmatpush1.bf16.msra.mxu0 0
      %275 = vmatprep.subr.bf16.mxu0 0
      %276 = vmatpush1.bf16.msra.mxu0 0
      %277 = vmatprep.subr.bf16.mxu0 0
      %278 = vmatpush1.bf16.msra.mxu0 0
      %279 = vmatprep.mubr.bf16.mxu0 0
      %280 = vmatmul.mubr.bf16.gmra.mrb[0].mxu0 %v224
      %v281 = vpop.f32.mrb[0].mxu0
      %v282 = vadd.f32 %v208, %v281
      %v283 = vpop.f32.mrb[0].mxu0
      %v284 = vpop.f32.mrb[0].mxu0
      %v285 = vadd.f32 %v208, %v284
      %v286 = vpop.f32.mrb[0].mxu0
      %287 = vmatprep.mubr.bf16.mxu0 0
      %288 = vmatmul.mubr.bf16.gmra.mrb[0].mxu0 %v227
      %v289 = vpop.f32.mrb[0].mxu0
      %v290 = vadd.f32 %v208, %v289
      %v291 = vpop.f32.mrb[0].mxu0
      %v292 = vpop.f32.mrb[0].mxu0
      %v293 = vadd.f32 %v208, %v292
      %v294 = vpop.f32.mrb[0].mxu0
      %295 = vmatprep.mubr.bf16.mxu0 0
      %296 = vmatmul.mubr.bf16.gmra.mrb[0].mxu0 %v230
      %v297 = vpop.f32.mrb[0].mxu0
      %v298 = vadd.f32 %v208, %v297
      %v299 = vpop.f32.mrb[0].mxu0
      %v300 = vpop.f32.mrb[0].mxu0
      %v301 = vadd.f32 %v208, %v300
      %v302 = vpop.f32.mrb[0].mxu0
      %303 = vmatprep.mubr.bf16.mxu0 0
      %304 = vmatmul.mubr.bf16.gmra.mrb[0].mxu0 %v233
      %v305 = vpop.f32.mrb[0].mxu0
      %v306 = vadd.f32 %v208, %v305
      %v307 = vpop.f32.mrb[0].mxu0
      %v308 = vpop.f32.mrb[0].mxu0
      %v309 = vadd.f32 %v208, %v308
      %v310 = vpop.f32.mrb[0].mxu0
      %311 = vmatprep.mubr.bf16.mxu0 0
      %312 = vmatmul.mubr.bf16.gmra.mrb[0].mxu0 %v236
      %v313 = vpop.f32.mrb[0].mxu0
      %v314 = vadd.f32 %v208, %v313
      %v315 = vpop.f32.mrb[0].mxu0
      %v316 = vpop.f32.mrb[0].mxu0
      %v317 = vadd.f32 %v208, %v316
      %v318 = vpop.f32.mrb[0].mxu0
      %319 = vmatprep.mubr.bf16.mxu0 0
      %320 = vmatmul.mubr.bf16.gmra.mrb[0].mxu0 %v239
      %v321 = vpop.f32.mrb[0].mxu0
      %v322 = vadd.f32 %v208, %v321
      %v323 = vpop.f32.mrb[0].mxu0
      %v324 = vpop.f32.mrb[0].mxu0
      %v325 = vadd.f32 %v208, %v324
      %v326 = vpop.f32.mrb[0].mxu0
      %327 = vmatprep.mubr.bf16.mxu0 0
      %328 = vmatmul.mubr.bf16.gmra.mrb[0].mxu0 %v242
      %v329 = vpop.f32.mrb[0].mxu0
      %v330 = vadd.f32 %v208, %v329
      %v331 = vpop.f32.mrb[0].mxu0
      %v332 = vpop.f32.mrb[0].mxu0
      %v333 = vadd.f32 %v208, %v332
      %v334 = vpop.f32.mrb[0].mxu0
      %335 = vmatprep.mubr.bf16.mxu0 0
      %336 = vmatmul.mubr.bf16.gmra.mrb[0].mxu0 %v245
      %v337 = vpop.f32.mrb[0].mxu0
      %v338 = vadd.f32 %v208, %v337
      %v339 = vpop.f32.mrb[0].mxu0
      %v340 = vpop.f32.mrb[0].mxu0
      %v341 = vadd.f32 %v208, %v340
      %v342 = vpop.f32.mrb[0].mxu0
      %343 = vdwg.mxu0
      %v344 = vxor.u32 %v282, 2147483648
      %v345 = vxor.u32 %v285, 2147483648
      %v346 = vxor.u32 %v290, 2147483648
      %v347 = vxor.u32 %v293, 2147483648
      %v348 = vxor.u32 %v298, 2147483648
      %v349 = vxor.u32 %v301, 2147483648
      %v350 = vxor.u32 %v306, 2147483648
      %v351 = vxor.u32 %v309, 2147483648
      %v352 = vxor.u32 %v314, 2147483648
      %v353 = vxor.u32 %v317, 2147483648
      %v354 = vxor.u32 %v322, 2147483648
      %v355 = vxor.u32 %v325, 2147483648
      %v356 = vxor.u32 %v330, 2147483648
      %v357 = vxor.u32 %v333, 2147483648
      %v358 = vxor.u32 %v338, 2147483648
      %v359 = vxor.u32 %v341, 2147483648
      %v360 = vmul.f32 %v344, 1.442695
      %v361 = vpow.pop %v360
      %v362 = vmul.f32 %v345, 1.442695
      %v363 = vpow.pop %v362
      %v364 = vmul.f32 %v346, 1.442695
      %v365 = vpow.pop %v364
      %v366 = vmul.f32 %v347, 1.442695
      %v367 = vpow.pop %v366
      %v368 = vmul.f32 %v348, 1.442695
      %v369 = vpow.pop %v368
      %v370 = vmul.f32 %v349, 1.442695
      %v371 = vpow.pop %v370
      %v372 = vmul.f32 %v350, 1.442695
      %v373 = vpow.pop %v372
      %v374 = vmul.f32 %v351, 1.442695
      %v375 = vpow.pop %v374
      %v376 = vmul.f32 %v352, 1.442695
      %v377 = vpow.pop %v376
      %v378 = vmul.f32 %v353, 1.442695
      %v379 = vpow.pop %v378
      %v380 = vmul.f32 %v354, 1.442695
      %v381 = vpow.pop %v380
      %v382 = vmul.f32 %v355, 1.442695
      %v383 = vpow.pop %v382
      %v384 = vmul.f32 %v356, 1.442695
      %v385 = vpow.pop %v384
      %v386 = vmul.f32 %v357, 1.442695
      %v387 = vpow.pop %v386
      %v388 = vmul.f32 %v358, 1.442695
      %v389 = vpow.pop %v388
      %v390 = vmul.f32 %v359, 1.442695
      %v391 = vpow.pop %v390
      %v392 = vadd.f32 %v361, 1.0
      %v393 = vadd.f32 %v363, 1.0
      %v394 = vadd.f32 %v365, 1.0
      %v395 = vadd.f32 %v367, 1.0
      %v396 = vadd.f32 %v369, 1.0
      %v397 = vadd.f32 %v371, 1.0
      %v398 = vadd.f32 %v373, 1.0
      %v399 = vadd.f32 %v375, 1.0
      %v400 = vadd.f32 %v377, 1.0
      %v401 = vadd.f32 %v379, 1.0
      %v402 = vadd.f32 %v381, 1.0
      %v403 = vadd.f32 %v383, 1.0
      %v404 = vadd.f32 %v385, 1.0
      %v405 = vadd.f32 %v387, 1.0
      %v406 = vadd.f32 %v389, 1.0
      %v407 = vadd.f32 %v391, 1.0
      %v408 = vrcp.pop %v392
      %v409 = vmul.f32 1.0, %v408
      %v410 = vrcp.pop %v393
      %v411 = vmul.f32 1.0, %v410
      %v412 = vrcp.pop %v394
      %v413 = vmul.f32 1.0, %v412
      %v414 = vrcp.pop %v395
      %v415 = vmul.f32 1.0, %v414
      %v416 = vrcp.pop %v396
      %v417 = vmul.f32 1.0, %v416
      %v418 = vrcp.pop %v397
      %v419 = vmul.f32 1.0, %v418
      %v420 = vrcp.pop %v398
      %v421 = vmul.f32 1.0, %v420
      %v422 = vrcp.pop %v399
      %v423 = vmul.f32 1.0, %v422
      %v424 = vrcp.pop %v400
      %v425 = vmul.f32 1.0, %v424
      %v426 = vrcp.pop %v401
      %v427 = vmul.f32 1.0, %v426
      %v428 = vrcp.pop %v402
      %v429 = vmul.f32 1.0, %v428
      %v430 = vrcp.pop %v403
      %v431 = vmul.f32 1.0, %v430
      %v432 = vrcp.pop %v404
      %v433 = vmul.f32 1.0, %v432
      %v434 = vrcp.pop %v405
      %v435 = vmul.f32 1.0, %v434
      %v436 = vrcp.pop %v406
      %v437 = vmul.f32 1.0, %v436
      %v438 = vrcp.pop %v407
      %v439 = vmul.f32 1.0, %v438
      %v440 = vpack.c.bf16 %v411, %v409
      %v441 = vpack.c.bf16 %v415, %v413
      %v442 = vpack.c.bf16 %v419, %v417
      %v443 = vpack.c.bf16 %v423, %v421
      %v444 = vpack.c.bf16 %v427, %v425
      %v445 = vpack.c.bf16 %v431, %v429
      %v446 = vpack.c.bf16 %v435, %v433
      %v447 = vpack.c.bf16 %v439, %v437
      %s448 = scalar_lea.vmem %s1, 64
      %v449 = vld [vmem:[%s448] sm:$0xf]
      %v450 = vld [vmem:[%s448 + $0x4] sm:$0xf]
      %v451 = vld [vmem:[%s448 + $0x8] sm:$0xf]
      %v452 = vld [vmem:[%s448 + $0xc] sm:$0xf]
      %v453 = vld [vmem:[%s448 + $0x10] sm:$0xf]
      %v454 = vld [vmem:[%s448 + $0x14] sm:$0xf]
      %v455 = vld [vmem:[%s448 + $0x18] sm:$0xf]
      %v456 = vld [vmem:[%s448 + $0x1c] sm:$0xf]
      %v457 = vld [vmem:[%s448 + $0x20] sm:$0xf]
      %v458 = vld [vmem:[%s448 + $0x24] sm:$0xf]
      %v459 = vld [vmem:[%s448 + $0x28] sm:$0xf]
      %v460 = vld [vmem:[%s448 + $0x2c] sm:$0xf]
      %v461 = vld [vmem:[%s448 + $0x30] sm:$0xf]
      %v462 = vld [vmem:[%s448 + $0x34] sm:$0xf]
      %v463 = vld [vmem:[%s448 + $0x38] sm:$0xf]
      %v464 = vld [vmem:[%s448 + $0x3c] sm:$0xf]
      %s465 = scalar_lea.vmem %s2, 1
      %v466 = vld [vmem:[%s465] sm:$0x1]
      %v468 = vlaneseq
      %v469 = vshrl.u32 %v468, 7
      %v470 = vsub.s32 0, %v469
      %v471 = vrot.slane %v466, %v470
      %v489 = vunpack.c.l.b16 %v449
      %v490 = vunpack.c.l.b16 %v450
      %v491 = vunpack.c.l.b16 %v451
      %v492 = vunpack.c.l.b16 %v452
      %v493 = vunpack.c.l.b16 %v453
      %v494 = vunpack.c.l.b16 %v454
      %v495 = vunpack.c.l.b16 %v455
      %v496 = vunpack.c.l.b16 %v456
      %v497 = vunpack.c.l.b16 %v457
      %v498 = vunpack.c.l.b16 %v458
      %v499 = vunpack.c.l.b16 %v459
      %v500 = vunpack.c.l.b16 %v460
      %v501 = vunpack.c.l.b16 %v461
      %v502 = vunpack.c.l.b16 %v462
      %v503 = vunpack.c.l.b16 %v463
      %v504 = vunpack.c.l.b16 %v464
      %v505 = vpack.c.b16 %v490, %v489
      %v506 = vpack.c.b16 %v492, %v491
      %v507 = vpack.c.b16 %v494, %v493
      %v508 = vpack.c.b16 %v496, %v495
      %v509 = vpack.c.b16 %v498, %v497
      %v510 = vpack.c.b16 %v500, %v499
      %v511 = vpack.c.b16 %v502, %v501
      %v512 = vpack.c.b16 %v504, %v503
      %521 = vmatprep.subr.bf16.mxu0 0
      %522 = vmatpush1.bf16.msra.mxu0 %v505
      %523 = vmatprep.subr.bf16.mxu0 0
      %524 = vmatpush1.bf16.msra.mxu0 %v506
      %525 = vmatprep.subr.bf16.mxu0 0
      %526 = vmatpush1.bf16.msra.mxu0 %v507
      %527 = vmatprep.subr.bf16.mxu0 0
      %528 = vmatpush1.bf16.msra.mxu0 %v508
      %529 = vmatprep.subr.bf16.mxu0 0
      %530 = vmatpush1.bf16.msra.mxu0 %v509
      %531 = vmatprep.subr.bf16.mxu0 0
      %532 = vmatpush1.bf16.msra.mxu0 %v510
      %533 = vmatprep.subr.bf16.mxu0 0
      %534 = vmatpush1.bf16.msra.mxu0 %v511
      %535 = vmatprep.subr.bf16.mxu0 0
      %536 = vmatpush1.bf16.msra.mxu0 %v512
      %537 = vmatprep.subr.bf16.mxu0 0
      %538 = vmatpush1.bf16.msra.mxu0 0
      %539 = vmatprep.subr.bf16.mxu0 0
      %540 = vmatpush1.bf16.msra.mxu0 0
      %541 = vmatprep.subr.bf16.mxu0 0
      %542 = vmatpush1.bf16.msra.mxu0 0
      %543 = vmatprep.subr.bf16.mxu0 0
      %544 = vmatpush1.bf16.msra.mxu0 0
      %545 = vmatprep.subr.bf16.mxu0 0
      %546 = vmatpush1.bf16.msra.mxu0 0
      %547 = vmatprep.subr.bf16.mxu0 0
      %548 = vmatpush1.bf16.msra.mxu0 0
      %549 = vmatprep.subr.bf16.mxu0 0
      %550 = vmatpush1.bf16.msra.mxu0 0
      %551 = vmatprep.subr.bf16.mxu0 0
      %552 = vmatpush1.bf16.msra.mxu0 0
      %553 = vmatprep.mubr.bf16.mxu0 0
      %554 = vmatmul.mubr.bf16.gmra.mrb[0].mxu0 %v440
      %v555 = vpop.f32.mrb[0].mxu0
      %v556 = vadd.f32 %v471, %v555
      %v557 = vpop.f32.mrb[0].mxu0
      %v558 = vpop.f32.mrb[0].mxu0
      %v559 = vadd.f32 %v471, %v558
      %v560 = vpop.f32.mrb[0].mxu0
      %561 = vmatprep.mubr.bf16.mxu0 0
      %562 = vmatmul.mubr.bf16.gmra.mrb[0].mxu0 %v441
      %v563 = vpop.f32.mrb[0].mxu0
      %v564 = vadd.f32 %v471, %v563
      %v565 = vpop.f32.mrb[0].mxu0
      %v566 = vpop.f32.mrb[0].mxu0
      %v567 = vadd.f32 %v471, %v566
      %v568 = vpop.f32.mrb[0].mxu0
      %569 = vmatprep.mubr.bf16.mxu0 0
      %570 = vmatmul.mubr.bf16.gmra.mrb[0].mxu0 %v442
      %v571 = vpop.f32.mrb[0].mxu0
      %v572 = vadd.f32 %v471, %v571
      %v573 = vpop.f32.mrb[0].mxu0
      %v574 = vpop.f32.mrb[0].mxu0
      %v575 = vadd.f32 %v471, %v574
      %v576 = vpop.f32.mrb[0].mxu0
      %577 = vmatprep.mubr.bf16.mxu0 0
      %578 = vmatmul.mubr.bf16.gmra.mrb[0].mxu0 %v443
      %v579 = vpop.f32.mrb[0].mxu0
      %v580 = vadd.f32 %v471, %v579
      %v581 = vpop.f32.mrb[0].mxu0
      %v582 = vpop.f32.mrb[0].mxu0
      %v583 = vadd.f32 %v471, %v582
      %v584 = vpop.f32.mrb[0].mxu0
      %585 = vmatprep.mubr.bf16.mxu0 0
      %586 = vmatmul.mubr.bf16.gmra.mrb[0].mxu0 %v444
      %v587 = vpop.f32.mrb[0].mxu0
      %v588 = vadd.f32 %v471, %v587
      %v589 = vpop.f32.mrb[0].mxu0
      %v590 = vpop.f32.mrb[0].mxu0
      %v591 = vadd.f32 %v471, %v590
      %v592 = vpop.f32.mrb[0].mxu0
      %593 = vmatprep.mubr.bf16.mxu0 0
      %594 = vmatmul.mubr.bf16.gmra.mrb[0].mxu0 %v445
      %v595 = vpop.f32.mrb[0].mxu0
      %v596 = vadd.f32 %v471, %v595
      %v597 = vpop.f32.mrb[0].mxu0
      %v598 = vpop.f32.mrb[0].mxu0
      %v599 = vadd.f32 %v471, %v598
      %v600 = vpop.f32.mrb[0].mxu0
      %601 = vmatprep.mubr.bf16.mxu0 0
      %602 = vmatmul.mubr.bf16.gmra.mrb[0].mxu0 %v446
      %v603 = vpop.f32.mrb[0].mxu0
      %v604 = vadd.f32 %v471, %v603
      %v605 = vpop.f32.mrb[0].mxu0
      %v606 = vpop.f32.mrb[0].mxu0
      %v607 = vadd.f32 %v471, %v606
      %v608 = vpop.f32.mrb[0].mxu0
      %609 = vmatprep.mubr.bf16.mxu0 0
      %610 = vmatmul.mubr.bf16.gmra.mrb[0].mxu0 %v447
      %v611 = vpop.f32.mrb[0].mxu0
      %v612 = vadd.f32 %v471, %v611
      %v613 = vpop.f32.mrb[0].mxu0
      %v614 = vpop.f32.mrb[0].mxu0
      %v615 = vadd.f32 %v471, %v614
      %v616 = vpop.f32.mrb[0].mxu0
      %617 = vdwg.mxu0
      %v618 = vxor.u32 %v556, 2147483648
      %v619 = vxor.u32 %v559, 2147483648
      %v620 = vxor.u32 %v564, 2147483648
      %v621 = vxor.u32 %v567, 2147483648
      %v622 = vxor.u32 %v572, 2147483648
      %v623 = vxor.u32 %v575, 2147483648
      %v624 = vxor.u32 %v580, 2147483648
      %v625 = vxor.u32 %v583, 2147483648
      %v626 = vxor.u32 %v588, 2147483648
      %v627 = vxor.u32 %v591, 2147483648
      %v628 = vxor.u32 %v596, 2147483648
      %v629 = vxor.u32 %v599, 2147483648
      %v630 = vxor.u32 %v604, 2147483648
      %v631 = vxor.u32 %v607, 2147483648
      %v632 = vxor.u32 %v612, 2147483648
      %v633 = vxor.u32 %v615, 2147483648
      %v634 = vmul.f32 %v618, 1.442695
      %v635 = vpow.pop %v634
      %v636 = vmul.f32 %v619, 1.442695
      %v637 = vpow.pop %v636
      %v638 = vmul.f32 %v620, 1.442695
      %v639 = vpow.pop %v638
      %v640 = vmul.f32 %v621, 1.442695
      %v641 = vpow.pop %v640
      %v642 = vmul.f32 %v622, 1.442695
      %v643 = vpow.pop %v642
      %v644 = vmul.f32 %v623, 1.442695
      %v645 = vpow.pop %v644
      %v646 = vmul.f32 %v624, 1.442695
      %v647 = vpow.pop %v646
      %v648 = vmul.f32 %v625, 1.442695
      %v649 = vpow.pop %v648
      %v650 = vmul.f32 %v626, 1.442695
      %v651 = vpow.pop %v650
      %v652 = vmul.f32 %v627, 1.442695
      %v653 = vpow.pop %v652
      %v654 = vmul.f32 %v628, 1.442695
      %v655 = vpow.pop %v654
      %v656 = vmul.f32 %v629, 1.442695
      %v657 = vpow.pop %v656
      %v658 = vmul.f32 %v630, 1.442695
      %v659 = vpow.pop %v658
      %v660 = vmul.f32 %v631, 1.442695
      %v661 = vpow.pop %v660
      %v662 = vmul.f32 %v632, 1.442695
      %v663 = vpow.pop %v662
      %v664 = vmul.f32 %v633, 1.442695
      %v665 = vpow.pop %v664
      %v666 = vadd.f32 %v635, 1.0
      %v667 = vadd.f32 %v637, 1.0
      %v668 = vadd.f32 %v639, 1.0
      %v669 = vadd.f32 %v641, 1.0
      %v670 = vadd.f32 %v643, 1.0
      %v671 = vadd.f32 %v645, 1.0
      %v672 = vadd.f32 %v647, 1.0
      %v673 = vadd.f32 %v649, 1.0
      %v674 = vadd.f32 %v651, 1.0
      %v675 = vadd.f32 %v653, 1.0
      %v676 = vadd.f32 %v655, 1.0
      %v677 = vadd.f32 %v657, 1.0
      %v678 = vadd.f32 %v659, 1.0
      %v679 = vadd.f32 %v661, 1.0
      %v680 = vadd.f32 %v663, 1.0
      %v681 = vadd.f32 %v665, 1.0
      %v682 = vrcp.pop %v666
      %v683 = vmul.f32 1.0, %v682
      %v684 = vrcp.pop %v667
      %v685 = vmul.f32 1.0, %v684
      %v686 = vrcp.pop %v668
      %v687 = vmul.f32 1.0, %v686
      %v688 = vrcp.pop %v669
      %v689 = vmul.f32 1.0, %v688
      %v690 = vrcp.pop %v670
      %v691 = vmul.f32 1.0, %v690
      %v692 = vrcp.pop %v671
      %v693 = vmul.f32 1.0, %v692
      %v694 = vrcp.pop %v672
      %v695 = vmul.f32 1.0, %v694
      %v696 = vrcp.pop %v673
      %v697 = vmul.f32 1.0, %v696
      %v698 = vrcp.pop %v674
      %v699 = vmul.f32 1.0, %v698
      %v700 = vrcp.pop %v675
      %v701 = vmul.f32 1.0, %v700
      %v702 = vrcp.pop %v676
      %v703 = vmul.f32 1.0, %v702
      %v704 = vrcp.pop %v677
      %v705 = vmul.f32 1.0, %v704
      %v706 = vrcp.pop %v678
      %v707 = vmul.f32 1.0, %v706
      %v708 = vrcp.pop %v679
      %v709 = vmul.f32 1.0, %v708
      %v710 = vrcp.pop %v680
      %v711 = vmul.f32 1.0, %v710
      %v712 = vrcp.pop %v681
      %v713 = vmul.f32 1.0, %v712
      %v714 = vpack.c.bf16 %v685, %v683
      %v715 = vpack.c.bf16 %v689, %v687
      %v716 = vpack.c.bf16 %v693, %v691
      %v717 = vpack.c.bf16 %v697, %v695
      %v718 = vpack.c.bf16 %v701, %v699
      %v719 = vpack.c.bf16 %v705, %v703
      %v720 = vpack.c.bf16 %v709, %v707
      %v721 = vpack.c.bf16 %v713, %v711
      %s722 = scalar_lea.vmem %s1, 128
      %v723 = vld [vmem:[%s722] sm:$0xf]
      %v724 = vld [vmem:[%s722 + $0x4] sm:$0xf]
      %v725 = vld [vmem:[%s722 + $0x8] sm:$0xf]
      %v726 = vld [vmem:[%s722 + $0xc] sm:$0xf]
      %v727 = vld [vmem:[%s722 + $0x10] sm:$0xf]
      %v728 = vld [vmem:[%s722 + $0x14] sm:$0xf]
      %v729 = vld [vmem:[%s722 + $0x18] sm:$0xf]
      %v730 = vld [vmem:[%s722 + $0x1c] sm:$0xf]
      %v731 = vld [vmem:[%s722 + $0x20] sm:$0xf]
      %v732 = vld [vmem:[%s722 + $0x24] sm:$0xf]
      %v733 = vld [vmem:[%s722 + $0x28] sm:$0xf]
      %v734 = vld [vmem:[%s722 + $0x2c] sm:$0xf]
      %v735 = vld [vmem:[%s722 + $0x30] sm:$0xf]
      %v736 = vld [vmem:[%s722 + $0x34] sm:$0xf]
      %v737 = vld [vmem:[%s722 + $0x38] sm:$0xf]
      %v738 = vld [vmem:[%s722 + $0x3c] sm:$0xf]
      %s739 = scalar_lea.vmem %s2, 2
      %v740 = vld [vmem:[%s739] sm:$0x1]
      %v742 = vlaneseq
      %v743 = vshrl.u32 %v742, 7
      %v744 = vsub.s32 0, %v743
      %v745 = vrot.slane %v740, %v744
      %v763 = vunpack.c.l.b16 %v723
      %v764 = vunpack.c.l.b16 %v724
      %v765 = vunpack.c.l.b16 %v725
      %v766 = vunpack.c.l.b16 %v726
      %v767 = vunpack.c.l.b16 %v727
      %v768 = vunpack.c.l.b16 %v728
      %v769 = vunpack.c.l.b16 %v729
      %v770 = vunpack.c.l.b16 %v730
      %v771 = vunpack.c.l.b16 %v731
      %v772 = vunpack.c.l.b16 %v732
      %v773 = vunpack.c.l.b16 %v733
      %v774 = vunpack.c.l.b16 %v734
      %v775 = vunpack.c.l.b16 %v735
      %v776 = vunpack.c.l.b16 %v736
      %v777 = vunpack.c.l.b16 %v737
      %v778 = vunpack.c.l.b16 %v738
      %v779 = vpack.c.b16 %v764, %v763
      %v780 = vpack.c.b16 %v766, %v765
      %v781 = vpack.c.b16 %v768, %v767
      %v782 = vpack.c.b16 %v770, %v769
      %v783 = vpack.c.b16 %v772, %v771
      %v784 = vpack.c.b16 %v774, %v773
      %v785 = vpack.c.b16 %v776, %v775
      %v786 = vpack.c.b16 %v778, %v777
      %795 = vmatprep.subr.bf16.mxu0 0
      %796 = vmatpush1.bf16.msra.mxu0 %v779
      %797 = vmatprep.subr.bf16.mxu0 0
      %798 = vmatpush1.bf16.msra.mxu0 %v780
      %799 = vmatprep.subr.bf16.mxu0 0
      %800 = vmatpush1.bf16.msra.mxu0 %v781
      %801 = vmatprep.subr.bf16.mxu0 0
      %802 = vmatpush1.bf16.msra.mxu0 %v782
      %803 = vmatprep.subr.bf16.mxu0 0
      %804 = vmatpush1.bf16.msra.mxu0 %v783
      %805 = vmatprep.subr.bf16.mxu0 0
      %806 = vmatpush1.bf16.msra.mxu0 %v784
      %807 = vmatprep.subr.bf16.mxu0 0
      %808 = vmatpush1.bf16.msra.mxu0 %v785
      %809 = vmatprep.subr.bf16.mxu0 0
      %810 = vmatpush1.bf16.msra.mxu0 %v786
      %811 = vmatprep.subr.bf16.mxu0 0
      %812 = vmatpush1.bf16.msra.mxu0 0
      %813 = vmatprep.subr.bf16.mxu0 0
      %814 = vmatpush1.bf16.msra.mxu0 0
      %815 = vmatprep.subr.bf16.mxu0 0
      %816 = vmatpush1.bf16.msra.mxu0 0
      %817 = vmatprep.subr.bf16.mxu0 0
      %818 = vmatpush1.bf16.msra.mxu0 0
      %819 = vmatprep.subr.bf16.mxu0 0
      %820 = vmatpush1.bf16.msra.mxu0 0
      %821 = vmatprep.subr.bf16.mxu0 0
      %822 = vmatpush1.bf16.msra.mxu0 0
      %823 = vmatprep.subr.bf16.mxu0 0
      %824 = vmatpush1.bf16.msra.mxu0 0
      %825 = vmatprep.subr.bf16.mxu0 0
      %826 = vmatpush1.bf16.msra.mxu0 0
      %827 = vmatprep.mubr.bf16.mxu0 0
      %828 = vmatmul.mubr.bf16.gmra.mrb[0].mxu0 %v714
      %v829 = vpop.f32.mrb[0].mxu0
      %v830 = vadd.f32 %v745, %v829
      %v831 = vpop.f32.mrb[0].mxu0
      %v832 = vpop.f32.mrb[0].mxu0
      %v833 = vadd.f32 %v745, %v832
      %v834 = vpop.f32.mrb[0].mxu0
      %835 = vmatprep.mubr.bf16.mxu0 0
      %836 = vmatmul.mubr.bf16.gmra.mrb[0].mxu0 %v715
      %v837 = vpop.f32.mrb[0].mxu0
      %v838 = vadd.f32 %v745, %v837
      %v839 = vpop.f32.mrb[0].mxu0
      %v840 = vpop.f32.mrb[0].mxu0
      %v841 = vadd.f32 %v745, %v840
      %v842 = vpop.f32.mrb[0].mxu0
      %843 = vmatprep.mubr.bf16.mxu0 0
      %844 = vmatmul.mubr.bf16.gmra.mrb[0].mxu0 %v716
      %v845 = vpop.f32.mrb[0].mxu0
      %v846 = vadd.f32 %v745, %v845
      %v847 = vpop.f32.mrb[0].mxu0
      %v848 = vpop.f32.mrb[0].mxu0
      %v849 = vadd.f32 %v745, %v848
      %v850 = vpop.f32.mrb[0].mxu0
      %851 = vmatprep.mubr.bf16.mxu0 0
      %852 = vmatmul.mubr.bf16.gmra.mrb[0].mxu0 %v717
      %v853 = vpop.f32.mrb[0].mxu0
      %v854 = vadd.f32 %v745, %v853
      %v855 = vpop.f32.mrb[0].mxu0
      %v856 = vpop.f32.mrb[0].mxu0
      %v857 = vadd.f32 %v745, %v856
      %v858 = vpop.f32.mrb[0].mxu0
      %859 = vmatprep.mubr.bf16.mxu0 0
      %860 = vmatmul.mubr.bf16.gmra.mrb[0].mxu0 %v718
      %v861 = vpop.f32.mrb[0].mxu0
      %v862 = vadd.f32 %v745, %v861
      %v863 = vpop.f32.mrb[0].mxu0
      %v864 = vpop.f32.mrb[0].mxu0
      %v865 = vadd.f32 %v745, %v864
      %v866 = vpop.f32.mrb[0].mxu0
      %867 = vmatprep.mubr.bf16.mxu0 0
      %868 = vmatmul.mubr.bf16.gmra.mrb[0].mxu0 %v719
      %v869 = vpop.f32.mrb[0].mxu0
      %v870 = vadd.f32 %v745, %v869
      %v871 = vpop.f32.mrb[0].mxu0
      %v872 = vpop.f32.mrb[0].mxu0
      %v873 = vadd.f32 %v745, %v872
      %v874 = vpop.f32.mrb[0].mxu0
      %875 = vmatprep.mubr.bf16.mxu0 0
      %876 = vmatmul.mubr.bf16.gmra.mrb[0].mxu0 %v720
      %v877 = vpop.f32.mrb[0].mxu0
      %v878 = vadd.f32 %v745, %v877
      %v879 = vpop.f32.mrb[0].mxu0
      %v880 = vpop.f32.mrb[0].mxu0
      %v881 = vadd.f32 %v745, %v880
      %v882 = vpop.f32.mrb[0].mxu0
      %883 = vmatprep.mubr.bf16.mxu0 0
      %884 = vmatmul.mubr.bf16.gmra.mrb[0].mxu0 %v721
      %v885 = vpop.f32.mrb[0].mxu0
      %v886 = vadd.f32 %v745, %v885
      %v887 = vpop.f32.mrb[0].mxu0
      %v888 = vpop.f32.mrb[0].mxu0
      %v889 = vadd.f32 %v745, %v888
      %v890 = vpop.f32.mrb[0].mxu0
      %891 = vdwg.mxu0
      %v892 = vxor.u32 %v830, 2147483648
      %v893 = vxor.u32 %v833, 2147483648
      %v894 = vxor.u32 %v838, 2147483648
      %v895 = vxor.u32 %v841, 2147483648
      %v896 = vxor.u32 %v846, 2147483648
      %v897 = vxor.u32 %v849, 2147483648
      %v898 = vxor.u32 %v854, 2147483648
      %v899 = vxor.u32 %v857, 2147483648
      %v900 = vxor.u32 %v862, 2147483648
      %v901 = vxor.u32 %v865, 2147483648
      %v902 = vxor.u32 %v870, 2147483648
      %v903 = vxor.u32 %v873, 2147483648
      %v904 = vxor.u32 %v878, 2147483648
      %v905 = vxor.u32 %v881, 2147483648
      %v906 = vxor.u32 %v886, 2147483648
      %v907 = vxor.u32 %v889, 2147483648
      %v908 = vmul.f32 %v892, 1.442695
      %v909 = vpow.pop %v908
      %v910 = vmul.f32 %v893, 1.442695
      %v911 = vpow.pop %v910
      %v912 = vmul.f32 %v894, 1.442695
      %v913 = vpow.pop %v912
      %v914 = vmul.f32 %v895, 1.442695
      %v915 = vpow.pop %v914
      %v916 = vmul.f32 %v896, 1.442695
      %v917 = vpow.pop %v916
      %v918 = vmul.f32 %v897, 1.442695
      %v919 = vpow.pop %v918
      %v920 = vmul.f32 %v898, 1.442695
      %v921 = vpow.pop %v920
      %v922 = vmul.f32 %v899, 1.442695
      %v923 = vpow.pop %v922
      %v924 = vmul.f32 %v900, 1.442695
      %v925 = vpow.pop %v924
      %v926 = vmul.f32 %v901, 1.442695
      %v927 = vpow.pop %v926
      %v928 = vmul.f32 %v902, 1.442695
      %v929 = vpow.pop %v928
      %v930 = vmul.f32 %v903, 1.442695
      %v931 = vpow.pop %v930
      %v932 = vmul.f32 %v904, 1.442695
      %v933 = vpow.pop %v932
      %v934 = vmul.f32 %v905, 1.442695
      %v935 = vpow.pop %v934
      %v936 = vmul.f32 %v906, 1.442695
      %v937 = vpow.pop %v936
      %v938 = vmul.f32 %v907, 1.442695
      %v939 = vpow.pop %v938
      %v940 = vadd.f32 %v909, 1.0
      %v941 = vadd.f32 %v911, 1.0
      %v942 = vadd.f32 %v913, 1.0
      %v943 = vadd.f32 %v915, 1.0
      %v944 = vadd.f32 %v917, 1.0
      %v945 = vadd.f32 %v919, 1.0
      %v946 = vadd.f32 %v921, 1.0
      %v947 = vadd.f32 %v923, 1.0
      %v948 = vadd.f32 %v925, 1.0
      %v949 = vadd.f32 %v927, 1.0
      %v950 = vadd.f32 %v929, 1.0
      %v951 = vadd.f32 %v931, 1.0
      %v952 = vadd.f32 %v933, 1.0
      %v953 = vadd.f32 %v935, 1.0
      %v954 = vadd.f32 %v937, 1.0
      %v955 = vadd.f32 %v939, 1.0
      %v956 = vrcp.pop %v940
      %v957 = vmul.f32 1.0, %v956
      %v958 = vrcp.pop %v941
      %v959 = vmul.f32 1.0, %v958
      %v960 = vrcp.pop %v942
      %v961 = vmul.f32 1.0, %v960
      %v962 = vrcp.pop %v943
      %v963 = vmul.f32 1.0, %v962
      %v964 = vrcp.pop %v944
      %v965 = vmul.f32 1.0, %v964
      %v966 = vrcp.pop %v945
      %v967 = vmul.f32 1.0, %v966
      %v968 = vrcp.pop %v946
      %v969 = vmul.f32 1.0, %v968
      %v970 = vrcp.pop %v947
      %v971 = vmul.f32 1.0, %v970
      %v972 = vrcp.pop %v948
      %v973 = vmul.f32 1.0, %v972
      %v974 = vrcp.pop %v949
      %v975 = vmul.f32 1.0, %v974
      %v976 = vrcp.pop %v950
      %v977 = vmul.f32 1.0, %v976
      %v978 = vrcp.pop %v951
      %v979 = vmul.f32 1.0, %v978
      %v980 = vrcp.pop %v952
      %v981 = vmul.f32 1.0, %v980
      %v982 = vrcp.pop %v953
      %v983 = vmul.f32 1.0, %v982
      %v984 = vrcp.pop %v954
      %v985 = vmul.f32 1.0, %v984
      %v986 = vrcp.pop %v955
      %v987 = vmul.f32 1.0, %v986
      %v988 = vpack.c.bf16 %v959, %v957
      %v989 = vpack.c.bf16 %v963, %v961
      %v990 = vpack.c.bf16 %v967, %v965
      %v991 = vpack.c.bf16 %v971, %v969
      %v992 = vpack.c.bf16 %v975, %v973
      %v993 = vpack.c.bf16 %v979, %v977
      %v994 = vpack.c.bf16 %v983, %v981
      %v995 = vpack.c.bf16 %v987, %v985
      %s996 = scalar_lea.vmem %s1, 192
      %v997 = vld [vmem:[%s996] sm:$0xf]
      %v998 = vld [vmem:[%s996 + $0x4] sm:$0xf]
      %v999 = vld [vmem:[%s996 + $0x8] sm:$0xf]
      %v1000 = vld [vmem:[%s996 + $0xc] sm:$0xf]
      %v1001 = vld [vmem:[%s996 + $0x10] sm:$0xf]
      %v1002 = vld [vmem:[%s996 + $0x14] sm:$0xf]
      %v1003 = vld [vmem:[%s996 + $0x18] sm:$0xf]
      %v1004 = vld [vmem:[%s996 + $0x1c] sm:$0xf]
      %v1005 = vld [vmem:[%s996 + $0x20] sm:$0xf]
      %v1006 = vld [vmem:[%s996 + $0x24] sm:$0xf]
      %v1007 = vld [vmem:[%s996 + $0x28] sm:$0xf]
      %v1008 = vld [vmem:[%s996 + $0x2c] sm:$0xf]
      %v1009 = vld [vmem:[%s996 + $0x30] sm:$0xf]
      %v1010 = vld [vmem:[%s996 + $0x34] sm:$0xf]
      %v1011 = vld [vmem:[%s996 + $0x38] sm:$0xf]
      %v1012 = vld [vmem:[%s996 + $0x3c] sm:$0xf]
      %s1013 = scalar_lea.vmem %s2, 3
      %v1014 = vld [vmem:[%s1013] sm:$0x1]
      %v1016 = vlaneseq
      %v1017 = vshrl.u32 %v1016, 7
      %v1018 = vsub.s32 0, %v1017
      %v1019 = vrot.slane %v1014, %v1018
      %v1037 = vunpack.c.l.b16 %v997
      %v1038 = vunpack.c.l.b16 %v998
      %v1039 = vunpack.c.l.b16 %v999
      %v1040 = vunpack.c.l.b16 %v1000
      %v1041 = vunpack.c.l.b16 %v1001
      %v1042 = vunpack.c.l.b16 %v1002
      %v1043 = vunpack.c.l.b16 %v1003
      %v1044 = vunpack.c.l.b16 %v1004
      %v1045 = vunpack.c.l.b16 %v1005
      %v1046 = vunpack.c.l.b16 %v1006
      %v1047 = vunpack.c.l.b16 %v1007
      %v1048 = vunpack.c.l.b16 %v1008
      %v1049 = vunpack.c.l.b16 %v1009
      %v1050 = vunpack.c.l.b16 %v1010
      %v1051 = vunpack.c.l.b16 %v1011
      %v1052 = vunpack.c.l.b16 %v1012
      %v1053 = vpack.c.b16 %v1038, %v1037
      %v1054 = vpack.c.b16 %v1040, %v1039
      %v1055 = vpack.c.b16 %v1042, %v1041
      %v1056 = vpack.c.b16 %v1044, %v1043
      %v1057 = vpack.c.b16 %v1046, %v1045
      %v1058 = vpack.c.b16 %v1048, %v1047
      %v1059 = vpack.c.b16 %v1050, %v1049
      %v1060 = vpack.c.b16 %v1052, %v1051
      %1069 = vmatprep.subr.bf16.mxu0 0
      %1070 = vmatpush1.bf16.msra.mxu0 %v1053
      %1071 = vmatprep.subr.bf16.mxu0 0
      %1072 = vmatpush1.bf16.msra.mxu0 %v1054
      %1073 = vmatprep.subr.bf16.mxu0 0
      %1074 = vmatpush1.bf16.msra.mxu0 %v1055
      %1075 = vmatprep.subr.bf16.mxu0 0
      %1076 = vmatpush1.bf16.msra.mxu0 %v1056
      %1077 = vmatprep.subr.bf16.mxu0 0
      %1078 = vmatpush1.bf16.msra.mxu0 %v1057
      %1079 = vmatprep.subr.bf16.mxu0 0
      %1080 = vmatpush1.bf16.msra.mxu0 %v1058
      %1081 = vmatprep.subr.bf16.mxu0 0
      %1082 = vmatpush1.bf16.msra.mxu0 %v1059
      %1083 = vmatprep.subr.bf16.mxu0 0
      %1084 = vmatpush1.bf16.msra.mxu0 %v1060
      %1085 = vmatprep.subr.bf16.mxu0 0
      %1086 = vmatpush1.bf16.msra.mxu0 0
      %1087 = vmatprep.subr.bf16.mxu0 0
      %1088 = vmatpush1.bf16.msra.mxu0 0
      %1089 = vmatprep.subr.bf16.mxu0 0
      %1090 = vmatpush1.bf16.msra.mxu0 0
      %1091 = vmatprep.subr.bf16.mxu0 0
      %1092 = vmatpush1.bf16.msra.mxu0 0
      %1093 = vmatprep.subr.bf16.mxu0 0
      %1094 = vmatpush1.bf16.msra.mxu0 0
      %1095 = vmatprep.subr.bf16.mxu0 0
      %1096 = vmatpush1.bf16.msra.mxu0 0
      %1097 = vmatprep.subr.bf16.mxu0 0
      %1098 = vmatpush1.bf16.msra.mxu0 0
      %1099 = vmatprep.subr.bf16.mxu0 0
      %1100 = vmatpush1.bf16.msra.mxu0 0
      %1101 = vmatprep.mubr.bf16.mxu0 0
      %1102 = vmatmul.mubr.bf16.gmra.mrb[0].mxu0 %v988
      %v1103 = vpop.f32.mrb[0].mxu0
      %v1104 = vadd.f32 %v1019, %v1103
      %v1105 = vpop.f32.mrb[0].mxu0
      %v1106 = vpop.f32.mrb[0].mxu0
      %v1107 = vadd.f32 %v1019, %v1106
      %v1108 = vpop.f32.mrb[0].mxu0
      %1109 = vmatprep.mubr.bf16.mxu0 0
      %1110 = vmatmul.mubr.bf16.gmra.mrb[0].mxu0 %v989
      %v1111 = vpop.f32.mrb[0].mxu0
      %v1112 = vadd.f32 %v1019, %v1111
      %v1113 = vpop.f32.mrb[0].mxu0
      %v1114 = vpop.f32.mrb[0].mxu0
      %v1115 = vadd.f32 %v1019, %v1114
      %v1116 = vpop.f32.mrb[0].mxu0
      %1117 = vmatprep.mubr.bf16.mxu0 0
      %1118 = vmatmul.mubr.bf16.gmra.mrb[0].mxu0 %v990
      %v1119 = vpop.f32.mrb[0].mxu0
      %v1120 = vadd.f32 %v1019, %v1119
      %v1121 = vpop.f32.mrb[0].mxu0
      %v1122 = vpop.f32.mrb[0].mxu0
      %v1123 = vadd.f32 %v1019, %v1122
      %v1124 = vpop.f32.mrb[0].mxu0
      %1125 = vmatprep.mubr.bf16.mxu0 0
      %1126 = vmatmul.mubr.bf16.gmra.mrb[0].mxu0 %v991
      %v1127 = vpop.f32.mrb[0].mxu0
      %v1128 = vadd.f32 %v1019, %v1127
      %v1129 = vpop.f32.mrb[0].mxu0
      %v1130 = vpop.f32.mrb[0].mxu0
      %v1131 = vadd.f32 %v1019, %v1130
      %v1132 = vpop.f32.mrb[0].mxu0
      %1133 = vmatprep.mubr.bf16.mxu0 0
      %1134 = vmatmul.mubr.bf16.gmra.mrb[0].mxu0 %v992
      %v1135 = vpop.f32.mrb[0].mxu0
      %v1136 = vadd.f32 %v1019, %v1135
      %v1137 = vpop.f32.mrb[0].mxu0
      %v1138 = vpop.f32.mrb[0].mxu0
      %v1139 = vadd.f32 %v1019, %v1138
      %v1140 = vpop.f32.mrb[0].mxu0
      %1141 = vmatprep.mubr.bf16.mxu0 0
      %1142 = vmatmul.mubr.bf16.gmra.mrb[0].mxu0 %v993
      %v1143 = vpop.f32.mrb[0].mxu0
      %v1144 = vadd.f32 %v1019, %v1143
      %v1145 = vpop.f32.mrb[0].mxu0
      %v1146 = vpop.f32.mrb[0].mxu0
      %v1147 = vadd.f32 %v1019, %v1146
      %v1148 = vpop.f32.mrb[0].mxu0
      %1149 = vmatprep.mubr.bf16.mxu0 0
      %1150 = vmatmul.mubr.bf16.gmra.mrb[0].mxu0 %v994
      %v1151 = vpop.f32.mrb[0].mxu0
      %v1152 = vadd.f32 %v1019, %v1151
      %v1153 = vpop.f32.mrb[0].mxu0
      %v1154 = vpop.f32.mrb[0].mxu0
      %v1155 = vadd.f32 %v1019, %v1154
      %v1156 = vpop.f32.mrb[0].mxu0
      %1157 = vmatprep.mubr.bf16.mxu0 0
      %1158 = vmatmul.mubr.bf16.gmra.mrb[0].mxu0 %v995
      %v1159 = vpop.f32.mrb[0].mxu0
      %v1160 = vadd.f32 %v1019, %v1159
      %v1161 = vpop.f32.mrb[0].mxu0
      %v1162 = vpop.f32.mrb[0].mxu0
      %v1163 = vadd.f32 %v1019, %v1162
      %v1164 = vpop.f32.mrb[0].mxu0
      %1165 = vdwg.mxu0
      %1166 = vst [vmem:[%s172] sm:$0xff] %v1104
      %1167 = vst [vmem:[%s172 + $0x8] sm:$0xff] %v1107
      %1168 = vst [vmem:[%s172 + $0x10] sm:$0xff] %v1112
      %1169 = vst [vmem:[%s172 + $0x18] sm:$0xff] %v1115
      %1170 = vst [vmem:[%s172 + $0x20] sm:$0xff] %v1120
      %1171 = vst [vmem:[%s172 + $0x28] sm:$0xff] %v1123
      %1172 = vst [vmem:[%s172 + $0x30] sm:$0xff] %v1128
      %1173 = vst [vmem:[%s172 + $0x38] sm:$0xff] %v1131
      %1174 = vst [vmem:[%s172 + $0x40] sm:$0xff] %v1136
      %1175 = vst [vmem:[%s172 + $0x48] sm:$0xff] %v1139
      %1176 = vst [vmem:[%s172 + $0x50] sm:$0xff] %v1144
      %1177 = vst [vmem:[%s172 + $0x58] sm:$0xff] %v1147
      %1178 = vst [vmem:[%s172 + $0x60] sm:$0xff] %v1152
      %1179 = vst [vmem:[%s172 + $0x68] sm:$0xff] %v1155
      %1180 = vst [vmem:[%s172 + $0x70] sm:$0xff] %v1160
      %1181 = vst [vmem:[%s172 + $0x78] sm:$0xff] %v1163
      %s1182 = smul.u32 16, %s14
      %p1183 = scmp.lt.s32.totalorder %s1182, 31
      %s1184 = scalar_select %p1183, %s1182, 31
      %s1185 = smul.addr %s1184, 8
      %s1186 = scalar_lea.vmem %s3, %s1185
      // Predicated region
      $region33: #{neural_net_forward.1} parent=31 // pred_check
        %p1187 = pneg %p100
      $region34: #{neural_net_forward.1} parent=31 // pred_check_branch
        %1189 = sbr.rel (%p1187) target = $region36
      $region35: #{neural_net_forward.1} parent=31 // pred_region
        %s1190 = smul.u32 16, %s14
      $region36: #{neural_net_forward.1} parent=31 // pred_fallthru
        _
    $region32: #{neural_net_forward.1} parent=5 // pred_fallthru
      _
    %p1191 = scmp.le.s32.totalorder 2, %s9
    // Predicated region
    $region37: #{neural_net_forward.1} parent=5 // pred_check
      %p1192 = pneg %p1191
    $region38: #{neural_net_forward.1} parent=5 // pred_check_branch
      %1194 = sbr.rel (%p1192) target = $region40
    $region39: #{neural_net_forward.1} parent=5 // pred_region
      %s1195 = ssub.s32 %s9, 2
      // Predicated region
      $region41: #{neural_net_forward.1} parent=39 // pred_check
        %p1196 = pneg %p106
      $region42: #{neural_net_forward.1} parent=39 // pred_check_branch
        %1198 = sbr.rel (%p1196) target = $region44
      $region43: #{neural_net_forward.1} parent=39 // pred_region
        %s1199 = smul.u32 16, %s15
        %p1200 = scmp.lt.s32.totalorder %s1199, 31
        %s1201 = scalar_select %p1200, %s1199, 31
        %s1202 = smul.addr %s1201, 8
        %s1203 = scalar_lea.vmem %s3, %s1202
      $region44: #{neural_net_forward.1} parent=39 // pred_fallthru
        _
    $region40: #{neural_net_forward.1} parent=5 // pred_fallthru
      _
  $region6: #{neural_net_forward.1} parent=0 // loop_footer
    %s13 = sadd.s32 1, %s9
  $region7: #{neural_net_forward.1} parent=0 // loop_footer_branch
    %8 = sbr.rel target = $region3
  $region8: #{neural_net_forward.1} parent=0 // loop_exit
    _

</llo_original>
